<compile_context>
chip_gen: v5e
topology: v5e:2x2
jax: 0.10.0
libtpu: 0.0.40
codegen_flags: <defaults>
</compile_context>

<pallas_src>
import functools
import math

import jax
import jax.numpy as jnp
from jax.experimental import pallas as pl
from jax.experimental.pallas import tpu as pltpu

LN_EPS = 1e-12
VMEM_LIMIT = 64 * 1024 * 1024   # raise scoped VMEM limit for the big-tile kernels


# ----------------------------------------------------------------------------
# tiling helpers
# ----------------------------------------------------------------------------
def _pick_tile(dim, cap, align):
    """Largest divisor of `dim` that is <= cap and a multiple of `align`;
    falls back to the full dim (always a legal BlockSpec block)."""
    if dim <= cap:
        return dim
    t = (cap // align) * align
    while t >= align:
        if dim % t == 0:
            return t
        t -= align
    # TODO(synk): pad + mask instead of falling back to a full-dim block.
    return dim


def _heads_per_group(num_heads, head_dim, seq_len):
    """Head-group size: output block lane-dense (blk % 128 == 0), preferably
    256-384 lanes wide, with the per-group (hg,S,S) f32 scores bounded ~8 MiB."""
    total = num_heads * head_dim
    if total <= 128 or total % 128 != 0:
        return num_heads
    candidates = [hg for hg in range(1, num_heads + 1)
                  if num_heads % hg == 0 and (hg * head_dim) % 128 == 0]
    if not candidates:
        return num_heads
    best = candidates[0]
    for hg in candidates:
        if hg * head_dim > 384:
            break
        if hg * seq_len * seq_len * 4 > 8 * 1024 * 1024:
            break
        best = hg
    return best


# ----------------------------------------------------------------------------
# dense:  y = act(x @ w + b),  bf16 in / bf16 out, f32 accumulator
# ----------------------------------------------------------------------------
def _dense_kernel(x_ref, w_ref, b_ref, o_ref, acc_ref, *, activation):
    @pl.when(pl.program_id(2) == 0)
    def _():
        acc_ref[...] = jnp.zeros_like(acc_ref)

    acc_ref[...] += jnp.dot(x_ref[...], w_ref[...],
                            preferred_element_type=jnp.float32)

    @pl.when(pl.program_id(2) == pl.num_programs(2) - 1)
    def _():
        y = acc_ref[...] + b_ref[...]                    # f32 element-wise
        if activation == "gelu":
            y = jax.nn.gelu(y, approximate=False)        # BERT exact (erf) gelu
        elif activation == "tanh":
            y = jnp.tanh(y)
        o_ref[...] = y.astype(o_ref.dtype)


def dense(x, w, b, activation=None):
    """x: (M,K) bf16, w: (K,N) bf16, b: (N,) f32 -> (M,N) bf16."""
    x = x.astype(jnp.bfloat16)
    M, K = x.shape
    K2, N = w.shape
    assert K == K2
    tm = _pick_tile(M, 512, 16)
    tn = _pick_tile(N, 768, 128)
    tk = K if K <= 1024 else _pick_tile(K, 512, 256)
    cost = pl.CostEstimate(
        flops=2 * M * N * K,
        transcendentals=M * N if activation else 0,
        bytes_accessed=M * K * 2 + K * N * 2 + M * N * 2)
    return pl.pallas_call(
        functools.partial(_dense_kernel, activation=activation),
        out_shape=jax.ShapeDtypeStruct((M, N), jnp.bfloat16),
        grid=(M // tm, N // tn, K // tk),
        in_specs=[
            pl.BlockSpec((tm, tk), lambda i, j, k: (i, k)),
            pl.BlockSpec((tk, tn), lambda i, j, k: (k, j)),
            pl.BlockSpec((1, tn), lambda i, j, k: (0, j)),
        ],
        out_specs=pl.BlockSpec((tm, tn), lambda i, j, k: (i, j)),
        scratch_shapes=[pltpu.VMEM((tm, tn), jnp.float32)],
        compiler_params=pltpu.CompilerParams(
            dimension_semantics=("parallel", "parallel", "arbitrary"),
            vmem_limit_bytes=VMEM_LIMIT),
        cost_estimate=cost,
    )(x, w, b.reshape(1, N))


# ----------------------------------------------------------------------------
# dense_add_ln:  LayerNorm(x @ w + b + residual), bf16 in/out, f32 math
# ----------------------------------------------------------------------------
def _dense_add_ln_kernel(x_ref, w_ref, b_ref, r_ref, g_ref, bb_ref, o_ref,
                         acc_ref, *, eps):
    @pl.when(pl.program_id(1) == 0)
    def _():
        acc_ref[...] = jnp.zeros_like(acc_ref)

    acc_ref[...] += jnp.dot(x_ref[...], w_ref[...],
                            preferred_element_type=jnp.float32)

    @pl.when(pl.program_id(1) == pl.num_programs(1) - 1)
    def _():
        y = acc_ref[...] + b_ref[...] + r_ref[...].astype(jnp.float32)
        mu = jnp.mean(y, axis=-1, keepdims=True)
        var = jnp.mean((y - mu) * (y - mu), axis=-1, keepdims=True)
        o_ref[...] = ((y - mu) * jax.lax.rsqrt(var + eps) * g_ref[...]
                      + bb_ref[...]).astype(o_ref.dtype)


def dense_add_ln(x, w, b, residual, gamma, beta):
    """N (=H) kept whole so LayerNorm sees full rows."""
    x = x.astype(jnp.bfloat16)
    residual = residual.astype(jnp.bfloat16)
    M, K = x.shape
    K2, N = w.shape
    assert K == K2
    tm = _pick_tile(M, 512, 16)
    tk = K if K <= 1024 else _pick_tile(K, 512, 256)
    cost = pl.CostEstimate(
        flops=2 * M * N * K,
        transcendentals=0,
        bytes_accessed=M * K * 2 + K * N * 2 + 3 * M * N * 2)
    return pl.pallas_call(
        functools.partial(_dense_add_ln_kernel, eps=LN_EPS),
        out_shape=jax.ShapeDtypeStruct((M, N), jnp.bfloat16),
        grid=(M // tm, K // tk),
        in_specs=[
            pl.BlockSpec((tm, tk), lambda i, k: (i, k)),
            pl.BlockSpec((tk, N), lambda i, k: (k, 0)),
            pl.BlockSpec((1, N), lambda i, k: (0, 0)),
            pl.BlockSpec((tm, N), lambda i, k: (i, 0)),
            pl.BlockSpec((1, N), lambda i, k: (0, 0)),
            pl.BlockSpec((1, N), lambda i, k: (0, 0)),
        ],
        out_specs=pl.BlockSpec((tm, N), lambda i, k: (i, 0)),
        scratch_shapes=[pltpu.VMEM((tm, N), jnp.float32)],
        compiler_params=pltpu.CompilerParams(
            dimension_semantics=("parallel", "arbitrary"),
            vmem_limit_bytes=VMEM_LIMIT),
        cost_estimate=cost,
    )(x, w, b.reshape(1, N), residual, gamma.reshape(1, N), beta.reshape(1, N))


# ----------------------------------------------------------------------------
# fused FFN:  LayerNorm(gelu(x @ wi + bi) @ wf + bf + residual)
#             intermediate (tm, I) activation never leaves VMEM
# ----------------------------------------------------------------------------
def _ffn_ln_kernel(x_ref, wi_ref, bi_ref, wf_ref, bf_ref, r_ref, g_ref, bb_ref,
                   o_ref, *, eps):
    up = jnp.dot(x_ref[...], wi_ref[...], preferred_element_type=jnp.float32)
    up = jax.nn.gelu(up + bi_ref[...], approximate=False).astype(jnp.bfloat16)
    y = jnp.dot(up, wf_ref[...], preferred_element_type=jnp.float32)
    y = y + bf_ref[...] + r_ref[...].astype(jnp.float32)
    mu = jnp.mean(y, axis=-1, keepdims=True)
    var = jnp.mean((y - mu) * (y - mu), axis=-1, keepdims=True)
    o_ref[...] = ((y - mu) * jax.lax.rsqrt(var + eps) * g_ref[...]
                  + bb_ref[...]).astype(o_ref.dtype)


def ffn_ln(x, wi, bi, wf, bf, residual, gamma, beta):
    x = x.astype(jnp.bfloat16)
    residual = residual.astype(jnp.bfloat16)
    M, K = x.shape
    K2, I = wi.shape
    I2, N = wf.shape
    assert K == K2 and I == I2
    tm = _pick_tile(M, 256, 16)    # weights + (tm, I) intermediate resident in VMEM
    cost = pl.CostEstimate(
        flops=2 * M * K * I + 2 * M * I * N,
        transcendentals=M * I,
        bytes_accessed=M * K * 2 + K * I * 2 + I * N * 2 + 2 * M * N * 2)
    return pl.pallas_call(
        functools.partial(_ffn_ln_kernel, eps=LN_EPS),
        out_shape=jax.ShapeDtypeStruct((M, N), jnp.bfloat16),
        grid=(M // tm,),
        in_specs=[
            pl.BlockSpec((tm, K), lambda i: (i, 0)),
            pl.BlockSpec((K, I), lambda i: (0, 0)),
            pl.BlockSpec((1, I), lambda i: (0, 0)),
            pl.BlockSpec((I, N), lambda i: (0, 0)),
            pl.BlockSpec((1, N), lambda i: (0, 0)),
            pl.BlockSpec((tm, N), lambda i: (i, 0)),
            pl.BlockSpec((1, N), lambda i: (0, 0)),
            pl.BlockSpec((1, N), lambda i: (0, 0)),
        ],
        out_specs=pl.BlockSpec((tm, N), lambda i: (i, 0)),
        compiler_params=pltpu.CompilerParams(
            dimension_semantics=("parallel",),
            vmem_limit_bytes=VMEM_LIMIT),
        cost_estimate=cost,
    )(x, wi, bi.reshape(1, I), wf, bf.reshape(1, N), residual,
      gamma.reshape(1, N), beta.reshape(1, N))


# ----------------------------------------------------------------------------
# standalone LayerNorm (embeddings)
# ----------------------------------------------------------------------------
def _ln_kernel(x_ref, g_ref, b_ref, o_ref, *, eps):
    x = x_ref[...].astype(jnp.float32)
    mu = jnp.mean(x, axis=-1, keepdims=True)
    var = jnp.mean((x - mu) * (x - mu), axis=-1, keepdims=True)
    o_ref[...] = ((x - mu) * jax.lax.rsqrt(var + eps) * g_ref[...]
                  + b_ref[...]).astype(o_ref.dtype)


def layernorm(x, gamma, beta):
    M, H = x.shape
    tm = _pick_tile(M, 512, 16)
    return pl.pallas_call(
        functools.partial(_ln_kernel, eps=LN_EPS),
        out_shape=jax.ShapeDtypeStruct((M, H), jnp.bfloat16),
        grid=(M // tm,),
        in_specs=[
            pl.BlockSpec((tm, H), lambda i: (i, 0)),
            pl.BlockSpec((1, H), lambda i: (0, 0)),
            pl.BlockSpec((1, H), lambda i: (0, 0)),
        ],
        out_specs=pl.BlockSpec((tm, H), lambda i: (i, 0)),
        compiler_params=pltpu.CompilerParams(dimension_semantics=("parallel",)),
    )(x, gamma.reshape(1, H), beta.reshape(1, H))


# ----------------------------------------------------------------------------
# attention over head groups, consuming the fused (B, S, 3H) QKV tensor
# ----------------------------------------------------------------------------
def _attn_kernel(q_ref, k_ref, v_ref, m_ref, o_ref, *, scale, heads, dh):
    bias = m_ref[0]                                           # (1, S) additive mask
    # fold the softmax scale into q once (instead of scaling every (S,S) tile)
    q = (q_ref[0].astype(jnp.float32) * scale).astype(jnp.bfloat16)
    k = k_ref[0]
    v = v_ref[0]
    for h in range(heads):
        lo = h * dh
        qh = q[:, lo:lo + dh]
        kh = k[:, lo:lo + dh]
        vh = v[:, lo:lo + dh]
        s = jax.lax.dot_general(qh, kh, (((1,), (1,)), ((), ())),
                                preferred_element_type=jnp.float32)
        s = s + bias
        s = s - jnp.max(s, axis=-1, keepdims=True)
        p = jnp.exp(s)                                        # EUP
        inv = pl.reciprocal(jnp.sum(p, axis=-1, keepdims=True), approx=True)
        p = (p * inv).astype(jnp.bfloat16)
        ctx = jnp.dot(p, vh, preferred_element_type=jnp.float32)
        # store each head directly into the output block (no concatenate);
        # bounds the per-head live range and keeps the block writeback lane-dense.
        o_ref[0, :, lo:lo + dh] = ctx.astype(o_ref.dtype)


def attention(qkv, mask_bias, scale, num_heads, head_dim):
    """qkv: (B, S, 3H) bf16 with heads packed along H; mask_bias: (B, 1, S) f32."""
    B, S, H3 = qkv.shape
    H = H3 // 3
    fused = (H % 128 == 0)
    if fused:
        hg = _heads_per_group(num_heads, head_dim, S)
        ng = num_heads // hg
        blk = hg * head_dim
        q_spec = pl.BlockSpec((1, S, blk), lambda b, g: (b, 0, g))
        k_spec = pl.BlockSpec((1, S, blk), lambda b, g, _n=ng: (b, 0, _n + g))
        v_spec = pl.BlockSpec((1, S, blk), lambda b, g, _n=ng: (b, 0, 2 * _n + g))
        args = (qkv, qkv, qkv, mask_bias)
    else:
        # small-model fallback: blk must equal the full last dim, so slice once.
        hg, ng, blk = num_heads, 1, H
        q = qkv[..., :H]
        k = qkv[..., H:2 * H]
        v = qkv[..., 2 * H:]
        spec = pl.BlockSpec((1, S, blk), lambda b, g: (b, 0, g))
        q_spec = k_spec = v_spec = spec
        args = (q, k, v, mask_bias)

    cost = pl.CostEstimate(
        flops=4 * B * num_heads * S * S * head_dim,
        transcendentals=B * num_heads * S * S,
        bytes_accessed=4 * B * S * H * 2 + B * S * 4)
    return pl.pallas_call(
        functools.partial(_attn_kernel, scale=scale, heads=hg, dh=head_dim),
        out_shape=jax.ShapeDtypeStruct((B, S, H), jnp.bfloat16),
        grid=(B, ng),
        in_specs=[q_spec, k_spec, v_spec,
                  pl.BlockSpec((1, 1, S), lambda b, g: (b, 0, 0))],
        out_specs=pl.BlockSpec((1, S, blk), lambda b, g: (b, 0, g)),
        compiler_params=pltpu.CompilerParams(
            dimension_semantics=("parallel", "parallel"),
            vmem_limit_bytes=VMEM_LIMIT),
        cost_estimate=cost,
    )(*args)


# ----------------------------------------------------------------------------
# pooling kernels (S-tiled accumulating reductions, f32 outputs)
# ----------------------------------------------------------------------------
def _meanpool_kernel(x_ref, o_ref, acc_ref, *, inv_len):
    @pl.when(pl.program_id(1) == 0)
    def _():
        acc_ref[...] = jnp.zeros_like(acc_ref)
    acc_ref[...] += jnp.sum(x_ref[...].astype(jnp.float32), axis=1)

    @pl.when(pl.program_id(1) == pl.num_programs(1) - 1)
    def _():
        o_ref[...] = acc_ref[...] * inv_len


def mean_pool(x):
    # x: (B, S, H) bf16 -> (B, H) f32 == torch.avg_pool1d(x.transpose(1,2), S)
    B, S, H = x.shape
    tb = _pick_tile(B, 8, 8)
    ts = _pick_tile(S, 256, 8)
    return pl.pallas_call(
        functools.partial(_meanpool_kernel, inv_len=1.0 / S),
        out_shape=jax.ShapeDtypeStruct((B, H), jnp.float32),
        grid=(B // tb, S // ts),
        in_specs=[pl.BlockSpec((tb, ts, H), lambda b, s: (b, s, 0))],
        out_specs=pl.BlockSpec((tb, H), lambda b, s: (b, 0)),
        scratch_shapes=[pltpu.VMEM((tb, H), jnp.float32)],
        compiler_params=pltpu.CompilerParams(
            dimension_semantics=("parallel", "arbitrary")),
    )(x)


def _first_last_avg_kernel(f_ref, l_ref, o_ref, acc_ref, *, inv_len):
    @pl.when(pl.program_id(1) == 0)
    def _():
        acc_ref[...] = jnp.zeros_like(acc_ref)
    acc_ref[...] += (jnp.sum(f_ref[...].astype(jnp.float32), axis=1)
                     + jnp.sum(l_ref[...].astype(jnp.float32), axis=1))

    @pl.when(pl.program_id(1) == pl.num_programs(1) - 1)
    def _():
        o_ref[...] = acc_ref[...] * inv_len


def first_last_avg(first, last):
    B, S, H = first.shape
    tb = _pick_tile(B, 8, 8)
    ts = _pick_tile(S, 256, 8)
    return pl.pallas_call(
        functools.partial(_first_last_avg_kernel, inv_len=1.0 / (2 * S)),
        out_shape=jax.ShapeDtypeStruct((B, H), jnp.float32),
        grid=(B // tb, S // ts),
        in_specs=[
            pl.BlockSpec((tb, ts, H), lambda b, s: (b, s, 0)),
            pl.BlockSpec((tb, ts, H), lambda b, s: (b, s, 0)),
        ],
        out_specs=pl.BlockSpec((tb, H), lambda b, s: (b, 0)),
        scratch_shapes=[pltpu.VMEM((tb, H), jnp.float32)],
        compiler_params=pltpu.CompilerParams(
            dimension_semantics=("parallel", "arbitrary")),
    )(first, last)


# ----------------------------------------------------------------------------
# BERT encoder built from the kernels above
# ----------------------------------------------------------------------------
def encoder_layer(x, p, mask_bias, B, S, cfg):
    H, NH, DH = cfg["hidden"], cfg["heads"], cfg["head_dim"]

    # fused Q|K|V projection; reshape is a free metadata op (no HBM copy)
    qkv = dense(x, p["w_qkv"], p["b_qkv"]).reshape(B, S, 3 * H)

    ctx = attention(qkv, mask_bias, 1.0 / math.sqrt(DH), NH, DH)   # (B, S, H) bf16
    ctx = ctx.reshape(B * S, H)

    # attention output projection fused with residual add + LayerNorm
    x = dense_add_ln(ctx, p["wo"], p["bo"], x, p["ln1_g"], p["ln1_b"])

    # FFN up-proj + gelu + down-proj + residual + LayerNorm fused in one kernel
    x = ffn_ln(x, p["wi"], p["bi"], p["wf"], p["bf"], x, p["ln2_g"], p["ln2_b"])
    return x


def bert_hidden_states(params, input_ids, attention_mask, token_type_ids, cfg):
    B, S = input_ids.shape
    H = cfg["hidden"]

    pos_ids = jnp.arange(S)
    emb = (params["word_emb"][input_ids]
           + params["pos_emb"][pos_ids][None, :, :]
           + params["type_emb"][token_type_ids])
    x = layernorm(emb.reshape(B * S, H).astype(jnp.float32),
                  params["emb_ln_g"], params["emb_ln_b"])          # -> bf16

    mask_bias = ((1.0 - attention_mask.astype(jnp.float32)) * -10000.0).reshape(B, 1, S)

    hidden_states = [x]          # hidden_states[0] == embedding output
    for layer in params["layers"]:
        x = encoder_layer(x, layer, mask_bias, B, S, cfg)
        hidden_states.append(x)
    return hidden_states


def simcse_forward(params, input_ids, attention_mask, token_type_ids, pooling, cfg):
    B, S = input_ids.shape
    H = cfg["hidden"]
    hs = bert_hidden_states(params, input_ids, attention_mask, token_type_ids, cfg)
    last = hs[-1].reshape(B, S, H)

    if pooling == "cls":
        return last[:, 0].astype(jnp.float32)
    if pooling == "pooler":
        cls = last[:, 0]
        return dense(cls, params["pooler_w"], params["pooler_b"],
                     activation="tanh").astype(jnp.float32)
    if pooling == "last-avg":
        return mean_pool(last)
    if pooling == "first-last-avg":
        first = hs[1].reshape(B, S, H)
        return first_last_avg(first, last)
    raise ValueError(pooling)


# ----------------------------------------------------------------------------
# Deterministic parameter init (synthetic, checkpoint-free)
# ----------------------------------------------------------------------------
def init_params(key, cfg):
    H, I = cfg["hidden"], cfg["intermediate"]
    keys = iter(jax.random.split(key, 16 + 8 * cfg["layers"]))

    def w_bf16(shape):           # matmul weights live in bf16 (MXU operands)
        return (0.02 * jax.random.normal(next(keys), shape)).astype(jnp.bfloat16)

    def w_f32(shape):
        return (0.02 * jax.random.normal(next(keys), shape)).astype(jnp.float32)

    params = {
        "word_emb": w_f32((cfg["vocab"], H)),
        "pos_emb": w_f32((cfg["max_pos"], H)),
        "type_emb": w_f32((cfg["type_vocab"], H)),
        "emb_ln_g": jnp.ones((H,), jnp.float32),
        "emb_ln_b": jnp.zeros((H,), jnp.float32),
        "pooler_w": w_bf16((H, H)),
        "pooler_b": jnp.zeros((H,), jnp.float32),
        "layers": [],
    }
    for _ in range(cfg["layers"]):
        params["layers"].append({
            "w_qkv": w_bf16((H, 3 * H)), "b_qkv": jnp.zeros((3 * H,), jnp.float32),
            "wo": w_bf16((H, H)), "bo": jnp.zeros((H,), jnp.float32),
            "ln1_g": jnp.ones((H,), jnp.float32), "ln1_b": jnp.zeros((H,), jnp.float32),
            "wi": w_bf16((H, I)), "bi": jnp.zeros((I,), jnp.float32),
            "wf": w_bf16((I, H)), "bf": jnp.zeros((H,), jnp.float32),
            "ln2_g": jnp.ones((H,), jnp.float32), "ln2_b": jnp.zeros((H,), jnp.float32),
        })
    return params


# ----------------------------------------------------------------------------
if __name__ == "__main__":
    cfg = dict(vocab=32, hidden=32, layers=2, heads=4, head_dim=8,
               intermediate=64, max_pos=16, type_vocab=2)

    key = jax.random.PRNGKey(0)
    k_ids, k_params = jax.random.split(key)

    B, S = 2, 8
    input_ids = jax.random.randint(k_ids, (B, S), 0, cfg["vocab"], dtype=jnp.int32)
    attention_mask = jnp.array([[1, 1, 1, 1, 1, 1, 1, 1],
                                [1, 1, 1, 1, 1, 1, 0, 0]], dtype=jnp.int32)
    token_type_ids = jnp.zeros((B, S), dtype=jnp.int32)

    params = init_params(k_params, cfg)

    for pooling in ("cls", "pooler", "last-avg", "first-last-avg"):
        out = simcse_forward(params, input_ids, attention_mask, token_type_ids,
                             pooling, cfg)
        out = jax.block_until_ready(out)
        assert out.shape == (B, cfg["hidden"]) and out.dtype == jnp.float32
        assert bool(jnp.all(jnp.isfinite(out)))

    print("KERNEL_OK")
</pallas_src>

<mosaic_0001>
module attributes {stable_mosaic.version = 11 : i64} {
  func.func @_ln_kernel(%arg0: i32, %arg1: memref<16x32xf32, #tpu.memory_space<vmem>>, %arg2: memref<1x32xf32, #tpu.memory_space<vmem>>, %arg3: memref<1x32xf32, #tpu.memory_space<vmem>>, %arg4: memref<16x32xbf16, #tpu.memory_space<vmem>>) attributes {dimension_semantics = [#tpu.dimension_semantics<parallel>], iteration_bounds = array<i64: 1>, scalar_prefetch = 0 : i64, scratch_operands = 0 : i64, tpu.core_type = #tpu.core_type<tc>, window_params = [{transform_indices = @transform_0, window_bounds = array<i64: 16, 32>}, {pipeline_mode = #tpu.pipeline_mode<synchronous>, transform_indices = @transform_1, window_bounds = array<i64: 1, 32>}, {pipeline_mode = #tpu.pipeline_mode<synchronous>, transform_indices = @transform_2, window_bounds = array<i64: 1, 32>}, {transform_indices = @transform_3, window_bounds = array<i64: 16, 32>}]} {
    %c0 = arith.constant 0 : index
    %c0_0 = arith.constant 0 : index
    %0 = vector.load %arg1[%c0, %c0_0] : memref<16x32xf32, #tpu.memory_space<vmem>>, vector<16x32xf32>
    %cst = arith.constant dense<0.000000e+00> : vector<16xf32>
    %1 = vector.multi_reduction <add>, %0, %cst [1] : vector<16x32xf32> to vector<16xf32>
    %2 = vector.shape_cast %1 : vector<16xf32> to vector<16x1xf32>
    %cst_1 = arith.constant 3.200000e+01 : f32
    %3 = vector.broadcast %cst_1 : f32 to vector<16x1xf32>
    %4 = arith.divf %2, %3 : vector<16x1xf32>
    %5 = vector.broadcast %4 : vector<16x1xf32> to vector<16x32xf32>
    %6 = arith.subf %0, %5 : vector<16x32xf32>
    %7 = vector.broadcast %4 : vector<16x1xf32> to vector<16x32xf32>
    %8 = arith.subf %0, %7 : vector<16x32xf32>
    %9 = arith.mulf %6, %8 : vector<16x32xf32>
    %cst_2 = arith.constant dense<0.000000e+00> : vector<16xf32>
    %10 = vector.multi_reduction <add>, %9, %cst_2 [1] : vector<16x32xf32> to vector<16xf32>
    %11 = vector.shape_cast %10 : vector<16xf32> to vector<16x1xf32>
    %cst_3 = arith.constant 3.200000e+01 : f32
    %12 = vector.broadcast %cst_3 : f32 to vector<16x1xf32>
    %13 = arith.divf %11, %12 : vector<16x1xf32>
    %14 = vector.broadcast %4 : vector<16x1xf32> to vector<16x32xf32>
    %15 = arith.subf %0, %14 : vector<16x32xf32>
    %cst_4 = arith.constant 9.99999996E-13 : f32
    %16 = vector.broadcast %cst_4 : f32 to vector<16x1xf32>
    %17 = arith.addf %13, %16 : vector<16x1xf32>
    %18 = math.rsqrt %17 : vector<16x1xf32>
    %19 = vector.broadcast %18 : vector<16x1xf32> to vector<16x32xf32>
    %20 = arith.mulf %15, %19 : vector<16x32xf32>
    %c0_5 = arith.constant 0 : index
    %c0_6 = arith.constant 0 : index
    %21 = vector.load %arg2[%c0_5, %c0_6] : memref<1x32xf32, #tpu.memory_space<vmem>>, vector<1x32xf32>
    %22 = vector.broadcast %21 : vector<1x32xf32> to vector<16x32xf32>
    %23 = arith.mulf %20, %22 : vector<16x32xf32>
    %c0_7 = arith.constant 0 : index
    %c0_8 = arith.constant 0 : index
    %24 = vector.load %arg3[%c0_7, %c0_8] : memref<1x32xf32, #tpu.memory_space<vmem>>, vector<1x32xf32>
    %25 = vector.broadcast %24 : vector<1x32xf32> to vector<16x32xf32>
    %26 = arith.addf %23, %25 : vector<16x32xf32>
    %27 = arith.truncf %26 : vector<16x32xf32> to vector<16x32xbf16>
    %c0_9 = arith.constant 0 : index
    %c0_10 = arith.constant 0 : index
    %28 = vector.load %arg4[%c0_9, %c0_10] : memref<16x32xbf16, #tpu.memory_space<vmem>>, vector<16x32xbf16>
    tpu.vector_store %arg4[%c0_9, %c0_10], %27 {strides = array<i32>} : memref<16x32xbf16, #tpu.memory_space<vmem>>, vector<16x32xbf16>,
    return
  }
  func.func @transform_0(%arg0: i32) -> (i32, i32) {
    %c0_i32 = arith.constant 0 : i32
    %c0_i32_0 = arith.constant 0 : i32
    return %arg0, %c0_i32 : i32, i32
  }
  func.func @transform_1(%arg0: i32) -> (i32, i32) {
    %c0_i32 = arith.constant 0 : i32
    %c0_i32_0 = arith.constant 0 : i32
    %c0_i32_1 = arith.constant 0 : i32
    return %c0_i32, %c0_i32_0 : i32, i32
  }
  func.func @transform_2(%arg0: i32) -> (i32, i32) {
    %c0_i32 = arith.constant 0 : i32
    %c0_i32_0 = arith.constant 0 : i32
    %c0_i32_1 = arith.constant 0 : i32
    return %c0_i32, %c0_i32_0 : i32, i32
  }
  func.func @transform_3(%arg0: i32) -> (i32, i32) {
    %c0_i32 = arith.constant 0 : i32
    %c0_i32_0 = arith.constant 0 : i32
    return %arg0, %c0_i32 : i32, i32
  }
}

</mosaic_0001>

<llo_original>
// kernel: tpu_custom_call.1
$region0: #{tpu_custom_call.1}
  #allocation0 [shape = 'u32[]', space=smem, size = 0x4, offset = 0x4, fixed_abs, tag = 'smem constant byte address 0x4 - core index']
  #allocation1 [shape = 'u32[72,128]{1,0:T(1,128)}', space=vmem, size = 0x9000, scoped, tag = 'internal scratch']
  %s0 = inlined_call_operand.hbm [shape: f32[16,32], index: 0, kind: input, shape index: {}]
  %s1 = inlined_call_operand.hbm [shape: f32[1,32], index: 1, kind: input, shape index: {}]
  %s2 = inlined_call_operand.vmem [shape: f32[1,32], index: 2, kind: input, shape index: {}]
  %s3 = inlined_call_operand.hbm [shape: bf16[16,32], index: 3, kind: output, shape index: {}]
  %s4 = sld [smem:[#allocation0]]
  $region30: #{tpu_custom_call.1} parent=0
    _
  %s6 = ssub.s32 1, %s4
  %s7 = scalar_select 0, %s6, %s4
  $region1: #{tpu_custom_call.1} parent=0
    #allocation2 [shape = 'u8[8192]{0}', space=vmem, size = 0x2000, scoped, tag = 'input window, operand 0, single buffered']
    #allocation3 [shape = 's32[1]{0}', space=sflag, size = 0x4, scoped, tag = 'scoped memory for tpu_custom_call.1']
    #allocation4 [shape = 's32[1]{0}', space=sflag, size = 0x4, scoped, tag = 'scoped memory for tpu_custom_call.1']
    #allocation5 [shape = 'u8[512]{0}', space=vmem, size = 0x400, scoped, tag = 'input window, operand 1, single buffered']
    #allocation6 [shape = 's32[1]{0}', space=sflag, size = 0x4, scoped, tag = 'scoped memory for tpu_custom_call.1']
    #allocation7 [shape = 'u8[4096]{0}', space=vmem, size = 0x1000, scoped, tag = 'output window, operand 0, single buffered']
    %8 = vsyncpa [#allocation3], 0
    %9 = vsyncpa [#allocation6], 0
    %10 = vsyncpa [#allocation4], 0
    // Predicated region
    $region2: #{tpu_custom_call.1} parent=1 // pred_check
      _
    $region3: #{tpu_custom_call.1} parent=1 // pred_check_branch
      %12 = sbr.rel (0) target = $region5
    $region4: #{tpu_custom_call.1} parent=1 // pred_region
      %14 = vsyncadd [#allocation3], 0
      %s15 = sshll.u32 %s0, 4
      %s16 = int_to_ptr.hbm [resolvable:$true] %s15
      %s17 = sshll.u32 [#allocation2], 4
      %s18 = int_to_ptr.vmem [resolvable:$true] %s17
      %23 = dma.hbm_to_vmem [thread:$0]  %s16, 256, %s18, [#allocation3], 128, 128, 8
    $region5: #{tpu_custom_call.1} parent=1 // pred_fallthru
      _
    // Predicated region
    $region6: #{tpu_custom_call.1} parent=1 // pred_check
      _
    $region7: #{tpu_custom_call.1} parent=1 // pred_check_branch
      %25 = sbr.rel (0) target = $region9
    $region8: #{tpu_custom_call.1} parent=1 // pred_region
      %27 = vsyncadd [#allocation6], 0
      %s29 = sshll.u32 %s1, 4
      %s30 = int_to_ptr.hbm [resolvable:$true] %s29
      %s31 = sshll.u32 [#allocation5], 4
      %s32 = int_to_ptr.vmem [resolvable:$true] %s31
      %34 = dma.hbm_to_vmem [thread:$0]  %s30, 16, %s32, [#allocation6]
    $region9: #{tpu_custom_call.1} parent=1 // pred_fallthru
      _
    // Predicated region
    $region10: #{tpu_custom_call.1} parent=1 // pred_check
      _
    $region11: #{tpu_custom_call.1} parent=1 // pred_check_branch
      %36 = sbr.rel (0) target = $region13
    $region12: #{tpu_custom_call.1} parent=1 // pred_region
      _
    $region13: #{tpu_custom_call.1} parent=1 // pred_fallthru
      _
    // Predicated region
    $region14: #{tpu_custom_call.1} parent=1 // pred_check
      _
    $region15: #{tpu_custom_call.1} parent=1 // pred_check_branch
      %38 = sbr.rel (0) target = $region17
    $region16: #{tpu_custom_call.1} parent=1 // pred_region
      %40 = dma.done [#allocation3], 256
    $region17: #{tpu_custom_call.1} parent=1 // pred_fallthru
      _
    // Predicated region
    $region18: #{tpu_custom_call.1} parent=1 // pred_check
      _
    $region19: #{tpu_custom_call.1} parent=1 // pred_check_branch
      %42 = sbr.rel (0) target = $region21
    $region20: #{tpu_custom_call.1} parent=1 // pred_region
      %44 = dma.done [#allocation6], 16
    $region21: #{tpu_custom_call.1} parent=1 // pred_fallthru
      _
    %v45 = vld [vmem:[#allocation2] sm:$0xff]
    %v46 = vld [vmem:[#allocation2 + $0x8] sm:$0xff]
    %vm47 = vcmask 261120
    %v48 = vsel %vm47, %v45, 0.0
    %49 = vadd.xlane.f32.xlu0 %v48
    %v50 = vpop.xlane.xlu0 %49
    %v51 = vsel %vm47, %v46, 0.0
    %52 = vadd.xlane.f32.xlu0 %v51
    %v53 = vpop.xlane.xlu0 %52
    %v54 = vrcp.pop 32.0
    %v55 = vmul.f32 32.0, %v54
    %v56 = vsub.f32 1.0, %v55
    %v57 = vmul.f32 %v54, %v56
    %v58 = vadd.f32 %v54, %v57
    %vm59 = vweird.f32 %v54
    %v60 = vsel %vm59, %v54, %v58
    %v61 = vmul.f32 %v50, %v60
    %v62 = vmul.f32 %v53, %v60
    %v63 = vsub.f32 %v45, %v61
    %v64 = vsub.f32 %v46, %v62
    %v65 = vmul.f32 %v63, %v63
    %v66 = vmul.f32 %v64, %v64
    %v67 = vsel %vm47, %v65, 0.0
    %68 = vadd.xlane.f32.xlu0 %v67
    %v69 = vpop.xlane.xlu0 %68
    %v70 = vsel %vm47, %v66, 0.0
    %71 = vadd.xlane.f32.xlu0 %v70
    %v72 = vpop.xlane.xlu0 %71
    %v73 = vmul.f32 %v69, %v60
    %v74 = vmul.f32 %v72, %v60
    %v75 = vadd.f32 %v73, 1e-12
    %v76 = vadd.f32 %v74, 1e-12
    %v77 = vrsqrt.pop %v75
    %v78 = vmul.f32 %v77, %v75
    %v79 = vmul.f32 %v78, %v77
    %v80 = vmul.f32 0.5, %v79
    %v81 = vsub.f32 1.5, %v80
    %v82 = vmul.f32 %v77, %v81
    %vm83 = vweird.f32 %v75
    %vm84 = vweird.f32 %v77
    %vm85 = vmor %vm83, %vm84
    %v86 = vsel %vm85, %v77, %v82
    %v87 = vrsqrt.pop %v76
    %v88 = vmul.f32 %v87, %v76
    %v89 = vmul.f32 %v88, %v87
    %v90 = vmul.f32 0.5, %v89
    %v91 = vsub.f32 1.5, %v90
    %v92 = vmul.f32 %v87, %v91
    %vm93 = vweird.f32 %v76
    %vm94 = vweird.f32 %v87
    %vm95 = vmor %vm93, %vm94
    %v96 = vsel %vm95, %v87, %v92
    %v97 = vmul.f32 %v63, %v86
    %v98 = vmul.f32 %v64, %v96
    %v99 = vld [vmem:[#allocation5] sm:$0x1]
    %v101 = vperm.slane %v99, 0
    %v103 = vmul.f32 %v97, %v101
    %v104 = vmul.f32 %v98, %v101
    %v105 = vld [vmem:[%s2] sm:$0x1]
    %v107 = vperm.slane %v105, 0
    %v109 = vadd.f32 %v103, %v107
    %v110 = vadd.f32 %v104, %v107
    %v111 = vpack.c.bf16 %v109, %v109
    %v112 = vpack.c.bf16 %v110, %v110
    %vm113 = vcmask 257024
    %114 = vst.msk [vmem:[#allocation7] sm:$0xf] %vm113, %v111
    %115 = vst.msk [vmem:[#allocation7 + $0x4] sm:$0xf] %vm113, %v112
    // Predicated region
    $region22: #{tpu_custom_call.1} parent=1 // pred_check
      _
    $region23: #{tpu_custom_call.1} parent=1 // pred_check_branch
      %117 = sbr.rel (0) target = $region25
    $region24: #{tpu_custom_call.1} parent=1 // pred_region
      %119 = vsyncadd [#allocation4], 0
      %s120 = sshll.u32 [#allocation7], 4
      %s121 = int_to_ptr.vmem [resolvable:$true] %s120
      %s122 = sshll.u32 %s3, 4
      %s123 = int_to_ptr.hbm [resolvable:$true] %s122
      %128 = dma.vmem_to_hbm [thread:$0]  %s121, 128, %s123, [#allocation4], 64, 64, 4
    $region25: #{tpu_custom_call.1} parent=1 // pred_fallthru
      _
    // Predicated region
    $region26: #{tpu_custom_call.1} parent=1 // pred_check
      _
    $region27: #{tpu_custom_call.1} parent=1 // pred_check_branch
      %130 = sbr.rel (0) target = $region29
    $region28: #{tpu_custom_call.1} parent=1 // pred_region
      %132 = dma.done [#allocation4], 128
    $region29: #{tpu_custom_call.1} parent=1 // pred_fallthru
      _
    %133 = vsyncpa [#allocation3], 1
    %134 = vsyncpa [#allocation6], 1
    %135 = vsyncpa [#allocation4], 1

</llo_original>
